<compile_context>
chip_gen: v5e
topology: v5e:2x2
jax: 0.10.0
libtpu: 0.0.40
codegen_flags: <defaults>
</compile_context>

<pallas_src>
import functools

import jax
import jax.numpy as jnp
from jax.experimental import pallas as pl
from jax.experimental.pallas import tpu as pltpu

LANE = 128            # TPU lane width; feature dims are padded to this.
BF16 = jnp.bfloat16


def _round_up(x, m):
    return ((x + m - 1) // m) * m


@functools.lru_cache(maxsize=1)
def _vmem_limit_bytes():
    """~75% of physical VMEM, capped: v7x -> ~48 MiB, v5e/v6e -> ~96-112 MiB."""
    try:
        cap = int(pltpu.get_tpu_info().vmem_capacity_bytes)
        return int(min(112 * 2**20, (cap * 3) // 4))
    except Exception:
        return 48 * 2**20   # conservative default (below v7x's 64 MiB physical)


# ---------------------------------------------------------------------------
# Fused path: whole 2-layer forward in ONE kernel (A_hat resident in VMEM).
# ---------------------------------------------------------------------------
def _fused_kernel(a_ref, x_ref, w1_ref, b1_ref, w2_ref, b2_ref,
                  out_ref, emb_ref):
    a = a_ref[...]                                       # bf16 A_hat, read once
    # layer 1: emb = A @ (X @ W1) + b1
    xw1 = jnp.dot(x_ref[...], w1_ref[...], preferred_element_type=jnp.float32)
    emb = jnp.dot(a, xw1.astype(BF16), preferred_element_type=jnp.float32)
    emb = emb + b1_ref[...]
    emb_ref[...] = emb
    # ReLU (+ dropout == identity in eval) and layer 2: out = A @ (h @ W2) + b2
    h = jnp.maximum(emb, 0.0).astype(BF16)
    xw2 = jnp.dot(h, w2_ref[...], preferred_element_type=jnp.float32)
    out_ref[...] = (jnp.dot(a, xw2.astype(BF16),
                            preferred_element_type=jnp.float32) + b2_ref[...])


def _fused_forward(a_p, x_p, w1_p, b1_p, w2_p, b2_p):
    n_pad = a_p.shape[0]
    hid_pad = w1_p.shape[1]
    out_pad = w2_p.shape[1]
    return pl.pallas_call(
        _fused_kernel,
        out_shape=(jax.ShapeDtypeStruct((n_pad, out_pad), jnp.float32),
                   jax.ShapeDtypeStruct((n_pad, hid_pad), jnp.float32)),
        compiler_params=pltpu.CompilerParams(
            vmem_limit_bytes=_vmem_limit_bytes()),
    )(a_p, x_p, w1_p, b1_p, w2_p, b2_p)


# ---------------------------------------------------------------------------
# Tiled path (large graphs): two K-tiled, row-parallel kernels.
# ---------------------------------------------------------------------------
def _const_spec(shape):
    """Constant-index-map operand; single-buffered when supported."""
    index_map = lambda i, k: (0, 0)
    try:
        return pl.BlockSpec(shape, index_map, pipeline_mode=pl.Buffered(1))
    except Exception:   # older jax: no pipeline_mode / pl.Buffered
        return pl.BlockSpec(shape, index_map)


def _layer1_kernel(a_ref, x_ref, w1_ref, b1_ref, w2_ref,
                   emb_ref, xw2_ref, acc_ref):
    k = pl.program_id(1)

    @pl.when(k == 0)
    def _():
        acc_ref[...] = jnp.zeros_like(acc_ref)

    # transform on the fly for this K-block: XW1_k = X_k @ W1 (cheap MXU work)
    xw1 = jnp.dot(x_ref[...], w1_ref[...], preferred_element_type=jnp.float32)
    acc_ref[...] += jnp.dot(a_ref[...], xw1.astype(BF16),
                            preferred_element_type=jnp.float32)

    @pl.when(k == pl.num_programs(1) - 1)
    def _():
        emb = acc_ref[...] + b1_ref[...]
        emb_ref[...] = emb
        # epilogue: fold layer-2 transform (ReLU + @W2) into this kernel
        h = jnp.maximum(emb, 0.0).astype(BF16)
        xw2 = jnp.dot(h, w2_ref[...], preferred_element_type=jnp.float32)
        xw2_ref[...] = xw2.astype(xw2_ref.dtype)


def _layer2_kernel(a_ref, xw_ref, b_ref, out_ref, acc_ref):
    k = pl.program_id(1)

    @pl.when(k == 0)
    def _():
        acc_ref[...] = jnp.zeros_like(acc_ref)

    acc_ref[...] += jnp.dot(a_ref[...], xw_ref[...],
                            preferred_element_type=jnp.float32)

    @pl.when(k == pl.num_programs(1) - 1)
    def _():
        out_ref[...] = (acc_ref[...] + b_ref[...]).astype(out_ref.dtype)


def _pick_row_tile(n_pad, max_tile=512):
    cands = [t for t in (512, 384, 256, 128) if t <= max_tile]
    for t in cands:        # prefer >=2 tiles with an even count (v7x 2-TC split)
        if n_pad % t == 0 and (n_pad // t) >= 2 and (n_pad // t) % 2 == 0:
            return t
    for t in cands:
        if n_pad % t == 0:
            return t
    return 128


def _pick_k_tile(n_pad, max_tile=2048):
    for t in (2048, 1024, 512, 256, 128):
        if t <= max_tile and n_pad % t == 0:
            return t
    return 128


def _tiled_forward(a_p, x_p, w1_p, b1_p, w2_p, b2_p):
    n_pad = a_p.shape[0]
    in_pad = x_p.shape[1]
    hid_pad = w1_p.shape[1]
    out_pad = w2_p.shape[1]

    row_tile = _pick_row_tile(n_pad)
    k_tile = _pick_k_tile(n_pad)
    grid = (n_pad // row_tile, n_pad // k_tile)
    cparams = pltpu.CompilerParams(
        dimension_semantics=("parallel", "arbitrary"),
        vmem_limit_bytes=_vmem_limit_bytes())

    a_spec = pl.BlockSpec((row_tile, k_tile), lambda i, k: (i, k))

    # layer 1 (+ fused layer-2 transform epilogue): emb, XW2
    emb_p, xw2_p = pl.pallas_call(
        _layer1_kernel,
        grid=grid,
        in_specs=[
            a_spec,                                                # A (i,k) tile
            pl.BlockSpec((k_tile, in_pad), lambda i, k: (k, 0)),   # X K-block
            _const_spec((in_pad, hid_pad)),                        # W1 resident
            _const_spec((1, hid_pad)),                             # b1 resident
            _const_spec((hid_pad, out_pad)),                       # W2 resident
        ],
        out_specs=(
            pl.BlockSpec((row_tile, hid_pad), lambda i, k: (i, 0)),
            pl.BlockSpec((row_tile, out_pad), lambda i, k: (i, 0)),
        ),
        out_shape=(jax.ShapeDtypeStruct((n_pad, hid_pad), jnp.float32),
                   jax.ShapeDtypeStruct((n_pad, out_pad), BF16)),
        scratch_shapes=[pltpu.VMEM((row_tile, hid_pad), jnp.float32)],
        compiler_params=cparams,
    )(a_p, x_p, w1_p, b1_p, w2_p)

    # layer 2: out = A @ XW2 + b2
    out_p = pl.pallas_call(
        _layer2_kernel,
        grid=grid,
        in_specs=[
            a_spec,
            pl.BlockSpec((k_tile, out_pad), lambda i, k: (k, 0)),  # XW2 K-block
            _const_spec((1, out_pad)),                             # b2 resident
        ],
        out_specs=pl.BlockSpec((row_tile, out_pad), lambda i, k: (i, 0)),
        out_shape=jax.ShapeDtypeStruct((n_pad, out_pad), jnp.float32),
        scratch_shapes=[pltpu.VMEM((row_tile, out_pad), jnp.float32)],
        compiler_params=cparams,
    )(a_p, xw2_p, b2_p)

    return out_p, emb_p


# ---------------------------------------------------------------------------
# Wrapper: full Net forward (conv1 -> relu -> [dropout=id] -> conv2)
# ---------------------------------------------------------------------------
@functools.partial(jax.jit, static_argnames=("force_tiled",))
def gcn_net_forward(a_pad, x, w1, b1, w2, b2, *, force_tiled=False):
    """Returns (out, x_emb) like the PyTorch module.

    a_pad: (n_pad, n_pad) bf16 normalized adjacency (self-loops added), n_pad a
           multiple of 128 (see build_normalized_adjacency_padded).
    x:     (n, in_size) node features, n <= n_pad.
    """
    n, in_size = x.shape
    hid_size = w1.shape[1]
    out_size = w2.shape[1]
    n_pad = a_pad.shape[0]

    in_pad = _round_up(in_size, LANE)
    hid_pad = _round_up(hid_size, LANE)
    out_pad = _round_up(out_size, LANE)

    # zero padding is exact: padded rows/cols contribute nothing.
    x_p = jnp.zeros((n_pad, in_pad), BF16).at[:n, :in_size].set(x.astype(BF16))
    w1_p = jnp.zeros((in_pad, hid_pad), BF16).at[:in_size, :hid_size].set(
        w1.astype(BF16))
    b1_p = jnp.zeros((1, hid_pad), jnp.float32).at[0, :hid_size].set(
        b1.reshape(-1).astype(jnp.float32))
    w2_p = jnp.zeros((hid_pad, out_pad), BF16).at[:hid_size, :out_size].set(
        w2.astype(BF16))
    b2_p = jnp.zeros((1, out_pad), jnp.float32).at[0, :out_size].set(
        b2.reshape(-1).astype(jnp.float32))

    # Fused single-kernel path when A_hat (+ small activations) fits VMEM;
    # otherwise the bounded-VMEM K-tiled two-kernel path.
    fused_bytes = 2 * n_pad * n_pad + 16 * LANE * n_pad
    if (not force_tiled) and fused_bytes <= _vmem_limit_bytes() // 2:
        out_p, emb_p = _fused_forward(a_pad, x_p, w1_p, b1_p, w2_p, b2_p)
    else:
        out_p, emb_p = _tiled_forward(a_pad, x_p, w1_p, b1_p, w2_p, b2_p)

    # x_emb is the raw conv1 output (pre-ReLU), matching the PyTorch module.
    return out_p[:n, :out_size], emb_p[:n, :hid_size]


def build_normalized_adjacency_padded(edge_index, edge_weight, num_nodes):
    """Dense bf16 A_hat = D^-1/2 (A + I) D^-1/2 built directly into a
    128-padded buffer (no f32 N^2 intermediate). Messages flow
    source (edge_index[0]) -> target (edge_index[1]), matching PyG GCNConv."""
    n_pad = _round_up(num_nodes, LANE)
    src = edge_index[0].astype(jnp.int32)
    dst = edge_index[1].astype(jnp.int32)
    loops = jnp.arange(num_nodes, dtype=jnp.int32)
    src = jnp.concatenate([src, loops])
    dst = jnp.concatenate([dst, loops])
    w = jnp.concatenate([edge_weight.astype(jnp.float32),
                         jnp.ones((num_nodes,), jnp.float32)])
    deg = jax.ops.segment_sum(w, dst, num_segments=num_nodes)  # in-degree @ dst
    d_inv_sqrt = jnp.where(deg > 0.0,
                           jax.lax.rsqrt(jnp.maximum(deg, 1e-12)), 0.0)
    w_norm = d_inv_sqrt[dst] * w * d_inv_sqrt[src]
    a = jnp.zeros((n_pad, n_pad), BF16)
    return a.at[dst, src].add(w_norm.astype(BF16))


if __name__ == "__main__":
    key = jax.random.PRNGKey(0)
    k_x, k_e, k_w, k_w1, k_w2, k_b1, k_b2 = jax.random.split(key, 7)

    # small synthetic graph consistent with Net(in_size=16, hid_size=8, out_size=2)
    num_nodes, num_edges = 256, 1024
    in_size, hid_size, out_size = 16, 8, 2

    x = jax.random.normal(k_x, (num_nodes, in_size), dtype=jnp.float32)
    edge_index = jax.random.randint(k_e, (2, num_edges), 0, num_nodes,
                                    dtype=jnp.int32)
    edge_weight = jax.random.uniform(k_w, (num_edges,), dtype=jnp.float32,
                                     minval=0.1, maxval=1.0)

    w1 = jax.random.normal(k_w1, (in_size, hid_size), dtype=jnp.float32) * 0.3
    b1 = jax.random.normal(k_b1, (hid_size,), dtype=jnp.float32) * 0.1
    w2 = jax.random.normal(k_w2, (hid_size, out_size), dtype=jnp.float32) * 0.3
    b2 = jax.random.normal(k_b2, (out_size,), dtype=jnp.float32) * 0.1

    # A_hat is static for a fixed graph: built once, hoisted out of the forward.
    a_pad = build_normalized_adjacency_padded(edge_index, edge_weight, num_nodes)

    # fused single-kernel path (A_hat fits VMEM)
    out_f, emb_f = gcn_net_forward(a_pad, x, w1, b1, w2, b2)
    out_f, emb_f = jax.block_until_ready((out_f, emb_f))

    # K-tiled two-kernel path (forced here for coverage; used for large graphs)
    out_t, emb_t = gcn_net_forward(a_pad, x, w1, b1, w2, b2, force_tiled=True)
    out_t, emb_t = jax.block_until_ready((out_t, emb_t))

    # pure-JAX reference mirroring the kernels' bf16-MXU / f32-accumulate math
    a_dense = a_pad[:num_nodes, :num_nodes].astype(jnp.float32)
    xw1_r = jnp.dot(x.astype(BF16), w1.astype(BF16),
                    preferred_element_type=jnp.float32)
    emb_r = jnp.dot(a_dense.astype(BF16), xw1_r.astype(BF16),
                    preferred_element_type=jnp.float32) + b1[None, :]
    h_r = jnp.maximum(emb_r, 0.0)
    xw2_r = jnp.dot(h_r.astype(BF16), w2.astype(BF16),
                    preferred_element_type=jnp.float32)
    out_r = jnp.dot(a_dense.astype(BF16), xw2_r.astype(BF16),
                    preferred_element_type=jnp.float32) + b2[None, :]

    for name, got, want in (("emb_fused", emb_f, emb_r),
                            ("out_fused", out_f, out_r),
                            ("emb_tiled", emb_t, emb_r),
                            ("out_tiled", out_t, out_r)):
        assert jnp.allclose(got, want, atol=5e-3, rtol=5e-3), f"{name} mismatch"

    print("KERNEL_OK")
</pallas_src>

<mosaic_0001>
module attributes {stable_mosaic.version = 11 : i64} {
  func.func @_fused_kernel(%arg0: memref<256x256xbf16, #tpu.memory_space<vmem>>, %arg1: memref<256x128xbf16, #tpu.memory_space<vmem>>, %arg2: memref<128x128xbf16, #tpu.memory_space<vmem>>, %arg3: memref<1x128xf32, #tpu.memory_space<vmem>>, %arg4: memref<128x128xbf16, #tpu.memory_space<vmem>>, %arg5: memref<1x128xf32, #tpu.memory_space<vmem>>, %arg6: memref<256x128xf32, #tpu.memory_space<vmem>>, %arg7: memref<256x128xf32, #tpu.memory_space<vmem>>) attributes {dimension_semantics = [], scalar_prefetch = 0 : i64, scratch_operands = 0 : i64, tpu.core_type = #tpu.core_type<tc>} {
    %c0 = arith.constant 0 : index
    %c0_0 = arith.constant 0 : index
    %0 = vector.load %arg0[%c0, %c0_0] : memref<256x256xbf16, #tpu.memory_space<vmem>>, vector<256x256xbf16>
    %c0_1 = arith.constant 0 : index
    %c0_2 = arith.constant 0 : index
    %1 = vector.load %arg1[%c0_1, %c0_2] : memref<256x128xbf16, #tpu.memory_space<vmem>>, vector<256x128xbf16>
    %c0_3 = arith.constant 0 : index
    %c0_4 = arith.constant 0 : index
    %2 = vector.load %arg2[%c0_3, %c0_4] : memref<128x128xbf16, #tpu.memory_space<vmem>>, vector<128x128xbf16>
    %cst = arith.constant dense<0.000000e+00> : vector<256x128xf32>
    %3 = tpu.matmul %1, %2, %cst {dimension_numbers = #tpu.dot_dimension_numbers<[1], [0], [0], [1], [0, 0, 1, 1], [], []>} : vector<256x128xbf16>, vector<128x128xbf16>, vector<256x128xf32> -> vector<256x128xf32>
    %4 = arith.truncf %3 : vector<256x128xf32> to vector<256x128xbf16>
    %cst_5 = arith.constant dense<0.000000e+00> : vector<256x128xf32>
    %5 = tpu.matmul %0, %4, %cst_5 {dimension_numbers = #tpu.dot_dimension_numbers<[1], [0], [0], [1], [0, 0, 1, 1], [], []>} : vector<256x256xbf16>, vector<256x128xbf16>, vector<256x128xf32> -> vector<256x128xf32>
    %c0_6 = arith.constant 0 : index
    %c0_7 = arith.constant 0 : index
    %6 = vector.load %arg3[%c0_6, %c0_7] : memref<1x128xf32, #tpu.memory_space<vmem>>, vector<1x128xf32>
    %7 = vector.broadcast %6 : vector<1x128xf32> to vector<256x128xf32>
    %8 = arith.addf %5, %7 : vector<256x128xf32>
    %c0_8 = arith.constant 0 : index
    %c0_9 = arith.constant 0 : index
    %9 = vector.load %arg7[%c0_8, %c0_9] : memref<256x128xf32, #tpu.memory_space<vmem>>, vector<256x128xf32>
    tpu.vector_store %arg7[%c0_8, %c0_9], %8 {strides = array<i32>} : memref<256x128xf32, #tpu.memory_space<vmem>>, vector<256x128xf32>,
    %cst_10 = arith.constant 0.000000e+00 : f32
    %10 = vector.broadcast %cst_10 : f32 to vector<256x128xf32>
    %11 = arith.maximumf %8, %10 : vector<256x128xf32>
    %12 = arith.truncf %11 : vector<256x128xf32> to vector<256x128xbf16>
    %c0_11 = arith.constant 0 : index
    %c0_12 = arith.constant 0 : index
    %13 = vector.load %arg4[%c0_11, %c0_12] : memref<128x128xbf16, #tpu.memory_space<vmem>>, vector<128x128xbf16>
    %cst_13 = arith.constant dense<0.000000e+00> : vector<256x128xf32>
    %14 = tpu.matmul %12, %13, %cst_13 {dimension_numbers = #tpu.dot_dimension_numbers<[1], [0], [0], [1], [0, 0, 1, 1], [], []>} : vector<256x128xbf16>, vector<128x128xbf16>, vector<256x128xf32> -> vector<256x128xf32>
    %15 = arith.truncf %14 : vector<256x128xf32> to vector<256x128xbf16>
    %cst_14 = arith.constant dense<0.000000e+00> : vector<256x128xf32>
    %16 = tpu.matmul %0, %15, %cst_14 {dimension_numbers = #tpu.dot_dimension_numbers<[1], [0], [0], [1], [0, 0, 1, 1], [], []>} : vector<256x256xbf16>, vector<256x128xbf16>, vector<256x128xf32> -> vector<256x128xf32>
    %c0_15 = arith.constant 0 : index
    %c0_16 = arith.constant 0 : index
    %17 = vector.load %arg5[%c0_15, %c0_16] : memref<1x128xf32, #tpu.memory_space<vmem>>, vector<1x128xf32>
    %18 = vector.broadcast %17 : vector<1x128xf32> to vector<256x128xf32>
    %19 = arith.addf %16, %18 : vector<256x128xf32>
    %c0_17 = arith.constant 0 : index
    %c0_18 = arith.constant 0 : index
    %20 = vector.load %arg6[%c0_17, %c0_18] : memref<256x128xf32, #tpu.memory_space<vmem>>, vector<256x128xf32>
    tpu.vector_store %arg6[%c0_17, %c0_18], %19 {strides = array<i32>} : memref<256x128xf32, #tpu.memory_space<vmem>>, vector<256x128xf32>,
    return
  }
}

</mosaic_0001>

<llo_original>
// kernel: gcn_net_forward.1
$region0: #{gcn_net_forward.1}
  #allocation0 [shape = 'u32[]', space=smem, size = 0x4, offset = 0x4, fixed_abs, tag = 'smem constant byte address 0x4 - core index']
  #allocation1 [shape = 'u32[72,128]{1,0:T(1,128)}', space=vmem, size = 0x9000, scoped, tag = 'internal scratch']
  %s0 = inlined_call_operand.vmem [shape: bf16[256,256], index: 0, kind: input, shape index: {}]
  %s1 = inlined_call_operand.vmem [shape: bf16[256,128], index: 1, kind: input, shape index: {}]
  %s2 = inlined_call_operand.vmem [shape: bf16[128,128], index: 2, kind: input, shape index: {}]
  %s3 = inlined_call_operand.vmem [shape: f32[1,128], index: 3, kind: input, shape index: {}]
  %s4 = inlined_call_operand.vmem [shape: bf16[128,128], index: 4, kind: input, shape index: {}]
  %s5 = inlined_call_operand.vmem [shape: f32[1,128], index: 5, kind: input, shape index: {}]
  %s6 = inlined_call_operand.vmem [shape: f32[256,128], index: 6, kind: output, shape index: {0}]
  %s7 = inlined_call_operand.vmem [shape: f32[256,128], index: 7, kind: output, shape index: {1}]
  %8 = xla_tuple %s6, %s7
  %s9 = sld [smem:[#allocation0]]
  $region42: #{gcn_net_forward.1} parent=0
    _
  %s11 = ssub.s32 1, %s9
  %s12 = scalar_select 0, %s11, %s9
  // Predicated region
  $region2: #{gcn_net_forward.1} parent=0 // pred_check
    _
  $region3: #{gcn_net_forward.1} parent=0 // pred_check_branch
    %14 = sbr.rel (0) target = $region5
  $region4: #{gcn_net_forward.1} parent=0 // pred_region
    _
  $region5: #{gcn_net_forward.1} parent=0 // pred_fallthru
    _
  // Predicated region
  $region6: #{gcn_net_forward.1} parent=0 // pred_check
    _
  $region7: #{gcn_net_forward.1} parent=0 // pred_check_branch
    %16 = sbr.rel (0) target = $region9
  $region8: #{gcn_net_forward.1} parent=0 // pred_region
    _
  $region9: #{gcn_net_forward.1} parent=0 // pred_fallthru
    _
  // Predicated region
  $region10: #{gcn_net_forward.1} parent=0 // pred_check
    _
  $region11: #{gcn_net_forward.1} parent=0 // pred_check_branch
    %18 = sbr.rel (0) target = $region13
  $region12: #{gcn_net_forward.1} parent=0 // pred_region
    _
  $region13: #{gcn_net_forward.1} parent=0 // pred_fallthru
    _
  // Predicated region
  $region14: #{gcn_net_forward.1} parent=0 // pred_check
    _
  $region15: #{gcn_net_forward.1} parent=0 // pred_check_branch
    %20 = sbr.rel (0) target = $region17
  $region16: #{gcn_net_forward.1} parent=0 // pred_region
    _
  $region17: #{gcn_net_forward.1} parent=0 // pred_fallthru
    _
  // Predicated region
  $region18: #{gcn_net_forward.1} parent=0 // pred_check
    _
  $region19: #{gcn_net_forward.1} parent=0 // pred_check_branch
    %22 = sbr.rel (0) target = $region21
  $region20: #{gcn_net_forward.1} parent=0 // pred_region
    _
  $region21: #{gcn_net_forward.1} parent=0 // pred_fallthru
    _
  // Predicated region
  $region22: #{gcn_net_forward.1} parent=0 // pred_check
    _
  $region23: #{gcn_net_forward.1} parent=0 // pred_check_branch
    %24 = sbr.rel (0) target = $region25
  $region24: #{gcn_net_forward.1} parent=0 // pred_region
    _
  $region25: #{gcn_net_forward.1} parent=0 // pred_fallthru
    _
  %v25 = vld [vmem:[%s0] sm:$0xff]
  %v26 = vld [vmem:[%s0 + $0x8] sm:$0xff]
  %v27 = vld [vmem:[%s0 + $0x10] sm:$0xff]
  %v28 = vld [vmem:[%s0 + $0x18] sm:$0xff]
  %v29 = vld [vmem:[%s0 + $0x20] sm:$0xff]
  %v30 = vld [vmem:[%s0 + $0x28] sm:$0xff]
  %v31 = vld [vmem:[%s0 + $0x30] sm:$0xff]
  %v32 = vld [vmem:[%s0 + $0x38] sm:$0xff]
  %v33 = vld [vmem:[%s0 + $0x40] sm:$0xff]
  %v34 = vld [vmem:[%s0 + $0x48] sm:$0xff]
  %v35 = vld [vmem:[%s0 + $0x50] sm:$0xff]
  %v36 = vld [vmem:[%s0 + $0x58] sm:$0xff]
  %v37 = vld [vmem:[%s0 + $0x60] sm:$0xff]
  %v38 = vld [vmem:[%s0 + $0x68] sm:$0xff]
  %v39 = vld [vmem:[%s0 + $0x70] sm:$0xff]
  %v40 = vld [vmem:[%s0 + $0x78] sm:$0xff]
  %v41 = vld [vmem:[%s0 + $0x80] sm:$0xff]
  %v42 = vld [vmem:[%s0 + $0x88] sm:$0xff]
  %v43 = vld [vmem:[%s0 + $0x90] sm:$0xff]
  %v44 = vld [vmem:[%s0 + $0x98] sm:$0xff]
  %v45 = vld [vmem:[%s0 + $0xa0] sm:$0xff]
  %v46 = vld [vmem:[%s0 + $0xa8] sm:$0xff]
  %v47 = vld [vmem:[%s0 + $0xb0] sm:$0xff]
  %v48 = vld [vmem:[%s0 + $0xb8] sm:$0xff]
  %v49 = vld [vmem:[%s0 + $0xc0] sm:$0xff]
  %v50 = vld [vmem:[%s0 + $0xc8] sm:$0xff]
  %v51 = vld [vmem:[%s0 + $0xd0] sm:$0xff]
  %v52 = vld [vmem:[%s0 + $0xd8] sm:$0xff]
  %v53 = vld [vmem:[%s0 + $0xe0] sm:$0xff]
  %v54 = vld [vmem:[%s0 + $0xe8] sm:$0xff]
  %v55 = vld [vmem:[%s0 + $0xf0] sm:$0xff]
  %v56 = vld [vmem:[%s0 + $0xf8] sm:$0xff]
  %v57 = vld [vmem:[%s1] sm:$0xf]
  %v58 = vld [vmem:[%s1 + $0x4] sm:$0xf]
  %v59 = vld [vmem:[%s1 + $0x8] sm:$0xf]
  %v60 = vld [vmem:[%s1 + $0xc] sm:$0xf]
  %v61 = vld [vmem:[%s1 + $0x10] sm:$0xf]
  %v62 = vld [vmem:[%s1 + $0x14] sm:$0xf]
  %v63 = vld [vmem:[%s1 + $0x18] sm:$0xf]
  %v64 = vld [vmem:[%s1 + $0x1c] sm:$0xf]
  %v65 = vld [vmem:[%s1 + $0x20] sm:$0xf]
  %v66 = vld [vmem:[%s1 + $0x24] sm:$0xf]
  %v67 = vld [vmem:[%s1 + $0x28] sm:$0xf]
  %v68 = vld [vmem:[%s1 + $0x2c] sm:$0xf]
  %v69 = vld [vmem:[%s1 + $0x30] sm:$0xf]
  %v70 = vld [vmem:[%s1 + $0x34] sm:$0xf]
  %v71 = vld [vmem:[%s1 + $0x38] sm:$0xf]
  %v72 = vld [vmem:[%s1 + $0x3c] sm:$0xf]
  %v73 = vld [vmem:[%s1 + $0x40] sm:$0xf]
  %v74 = vld [vmem:[%s1 + $0x44] sm:$0xf]
  %v75 = vld [vmem:[%s1 + $0x48] sm:$0xf]
  %v76 = vld [vmem:[%s1 + $0x4c] sm:$0xf]
  %v77 = vld [vmem:[%s1 + $0x50] sm:$0xf]
  %v78 = vld [vmem:[%s1 + $0x54] sm:$0xf]
  %v79 = vld [vmem:[%s1 + $0x58] sm:$0xf]
  %v80 = vld [vmem:[%s1 + $0x5c] sm:$0xf]
  %v81 = vld [vmem:[%s1 + $0x60] sm:$0xf]
  %v82 = vld [vmem:[%s1 + $0x64] sm:$0xf]
  %v83 = vld [vmem:[%s1 + $0x68] sm:$0xf]
  %v84 = vld [vmem:[%s1 + $0x6c] sm:$0xf]
  %v85 = vld [vmem:[%s1 + $0x70] sm:$0xf]
  %v86 = vld [vmem:[%s1 + $0x74] sm:$0xf]
  %v87 = vld [vmem:[%s1 + $0x78] sm:$0xf]
  %v88 = vld [vmem:[%s1 + $0x7c] sm:$0xf]
  %v89 = vld [vmem:[%s2] sm:$0xf]
  %v90 = vld [vmem:[%s2 + $0x4] sm:$0xf]
  %v91 = vld [vmem:[%s2 + $0x8] sm:$0xf]
  %v92 = vld [vmem:[%s2 + $0xc] sm:$0xf]
  %v93 = vld [vmem:[%s2 + $0x10] sm:$0xf]
  %v94 = vld [vmem:[%s2 + $0x14] sm:$0xf]
  %v95 = vld [vmem:[%s2 + $0x18] sm:$0xf]
  %v96 = vld [vmem:[%s2 + $0x1c] sm:$0xf]
  %v97 = vld [vmem:[%s2 + $0x20] sm:$0xf]
  %v98 = vld [vmem:[%s2 + $0x24] sm:$0xf]
  %v99 = vld [vmem:[%s2 + $0x28] sm:$0xf]
  %v100 = vld [vmem:[%s2 + $0x2c] sm:$0xf]
  %v101 = vld [vmem:[%s2 + $0x30] sm:$0xf]
  %v102 = vld [vmem:[%s2 + $0x34] sm:$0xf]
  %v103 = vld [vmem:[%s2 + $0x38] sm:$0xf]
  %v104 = vld [vmem:[%s2 + $0x3c] sm:$0xf]
  %v137 = vunpack.c.l.b16 %v57
  %v138 = vunpack.c.l.b16 %v58
  %v139 = vunpack.c.l.b16 %v59
  %v140 = vunpack.c.l.b16 %v60
  %v141 = vunpack.c.l.b16 %v61
  %v142 = vunpack.c.l.b16 %v62
  %v143 = vunpack.c.l.b16 %v63
  %v144 = vunpack.c.l.b16 %v64
  %v145 = vunpack.c.l.b16 %v65
  %v146 = vunpack.c.l.b16 %v66
  %v147 = vunpack.c.l.b16 %v67
  %v148 = vunpack.c.l.b16 %v68
  %v149 = vunpack.c.l.b16 %v69
  %v150 = vunpack.c.l.b16 %v70
  %v151 = vunpack.c.l.b16 %v71
  %v152 = vunpack.c.l.b16 %v72
  %v153 = vunpack.c.l.b16 %v73
  %v154 = vunpack.c.l.b16 %v74
  %v155 = vunpack.c.l.b16 %v75
  %v156 = vunpack.c.l.b16 %v76
  %v157 = vunpack.c.l.b16 %v77
  %v158 = vunpack.c.l.b16 %v78
  %v159 = vunpack.c.l.b16 %v79
  %v160 = vunpack.c.l.b16 %v80
  %v161 = vunpack.c.l.b16 %v81
  %v162 = vunpack.c.l.b16 %v82
  %v163 = vunpack.c.l.b16 %v83
  %v164 = vunpack.c.l.b16 %v84
  %v165 = vunpack.c.l.b16 %v85
  %v166 = vunpack.c.l.b16 %v86
  %v167 = vunpack.c.l.b16 %v87
  %v168 = vunpack.c.l.b16 %v88
  %v169 = vpack.c.b16 %v138, %v137
  %v170 = vpack.c.b16 %v140, %v139
  %v171 = vpack.c.b16 %v142, %v141
  %v172 = vpack.c.b16 %v144, %v143
  %v173 = vpack.c.b16 %v146, %v145
  %v174 = vpack.c.b16 %v148, %v147
  %v175 = vpack.c.b16 %v150, %v149
  %v176 = vpack.c.b16 %v152, %v151
  %v177 = vpack.c.b16 %v154, %v153
  %v178 = vpack.c.b16 %v156, %v155
  %v179 = vpack.c.b16 %v158, %v157
  %v180 = vpack.c.b16 %v160, %v159
  %v181 = vpack.c.b16 %v162, %v161
  %v182 = vpack.c.b16 %v164, %v163
  %v183 = vpack.c.b16 %v166, %v165
  %v184 = vpack.c.b16 %v168, %v167
  %v217 = vunpack.c.l.b16 %v89
  %v218 = vunpack.c.l.b16 %v90
  %v219 = vunpack.c.l.b16 %v91
  %v220 = vunpack.c.l.b16 %v92
  %v221 = vunpack.c.l.b16 %v93
  %v222 = vunpack.c.l.b16 %v94
  %v223 = vunpack.c.l.b16 %v95
  %v224 = vunpack.c.l.b16 %v96
  %v225 = vunpack.c.l.b16 %v97
  %v226 = vunpack.c.l.b16 %v98
  %v227 = vunpack.c.l.b16 %v99
  %v228 = vunpack.c.l.b16 %v100
  %v229 = vunpack.c.l.b16 %v101
  %v230 = vunpack.c.l.b16 %v102
  %v231 = vunpack.c.l.b16 %v103
  %v232 = vunpack.c.l.b16 %v104
  %v233 = vpack.c.b16 %v218, %v217
  %v234 = vpack.c.b16 %v220, %v219
  %v235 = vpack.c.b16 %v222, %v221
  %v236 = vpack.c.b16 %v224, %v223
  %v237 = vpack.c.b16 %v226, %v225
  %v238 = vpack.c.b16 %v228, %v227
  %v239 = vpack.c.b16 %v230, %v229
  %v240 = vpack.c.b16 %v232, %v231
  %249 = vmatpush.bf16.msra.mxu0 %v240
  %250 = vmatpush.bf16.msra.mxu0 %v239
  %251 = vmatpush.bf16.msra.mxu0 %v238
  %252 = vmatpush.bf16.msra.mxu0 %v237
  %253 = vmatpush.bf16.msra.mxu0 %v236
  %254 = vmatpush.bf16.msra.mxu0 %v235
  %255 = vmatpush.bf16.msra.mxu0 %v234
  %256 = vmatpush.bf16.msra.mxu0 %v233
  %257 = vmatmul.bf16.gmra.mxu0 %v169
  %v258 = vpop.f32.mrf.mxu0
  %v259 = vadd.f32 0.0, %v258
  %v260 = vpop.f32.mrf.mxu0
  %v261 = vadd.f32 0.0, %v260
  %262 = vmatmul.bf16.gmra.mxu0 %v170
  %v263 = vpop.f32.mrf.mxu0
  %v264 = vadd.f32 0.0, %v263
  %v265 = vpop.f32.mrf.mxu0
  %v266 = vadd.f32 0.0, %v265
  %267 = vmatmul.bf16.gmra.mxu0 %v171
  %v268 = vpop.f32.mrf.mxu0
  %v269 = vadd.f32 0.0, %v268
  %v270 = vpop.f32.mrf.mxu0
  %v271 = vadd.f32 0.0, %v270
  %272 = vmatmul.bf16.gmra.mxu0 %v172
  %v273 = vpop.f32.mrf.mxu0
  %v274 = vadd.f32 0.0, %v273
  %v275 = vpop.f32.mrf.mxu0
  %v276 = vadd.f32 0.0, %v275
  %277 = vmatmul.bf16.gmra.mxu0 %v173
  %v278 = vpop.f32.mrf.mxu0
  %v279 = vadd.f32 0.0, %v278
  %v280 = vpop.f32.mrf.mxu0
  %v281 = vadd.f32 0.0, %v280
  %282 = vmatmul.bf16.gmra.mxu0 %v174
  %v283 = vpop.f32.mrf.mxu0
  %v284 = vadd.f32 0.0, %v283
  %v285 = vpop.f32.mrf.mxu0
  %v286 = vadd.f32 0.0, %v285
  %287 = vmatmul.bf16.gmra.mxu0 %v175
  %v288 = vpop.f32.mrf.mxu0
  %v289 = vadd.f32 0.0, %v288
  %v290 = vpop.f32.mrf.mxu0
  %v291 = vadd.f32 0.0, %v290
  %292 = vmatmul.bf16.gmra.mxu0 %v176
  %v293 = vpop.f32.mrf.mxu0
  %v294 = vadd.f32 0.0, %v293
  %v295 = vpop.f32.mrf.mxu0
  %v296 = vadd.f32 0.0, %v295
  %297 = vmatmul.bf16.gmra.mxu0 %v177
  %v298 = vpop.f32.mrf.mxu0
  %v299 = vadd.f32 0.0, %v298
  %v300 = vpop.f32.mrf.mxu0
  %v301 = vadd.f32 0.0, %v300
  %302 = vmatmul.bf16.gmra.mxu0 %v178
  %v303 = vpop.f32.mrf.mxu0
  %v304 = vadd.f32 0.0, %v303
  %v305 = vpop.f32.mrf.mxu0
  %v306 = vadd.f32 0.0, %v305
  %307 = vmatmul.bf16.gmra.mxu0 %v179
  %v308 = vpop.f32.mrf.mxu0
  %v309 = vadd.f32 0.0, %v308
  %v310 = vpop.f32.mrf.mxu0
  %v311 = vadd.f32 0.0, %v310
  %312 = vmatmul.bf16.gmra.mxu0 %v180
  %v313 = vpop.f32.mrf.mxu0
  %v314 = vadd.f32 0.0, %v313
  %v315 = vpop.f32.mrf.mxu0
  %v316 = vadd.f32 0.0, %v315
  %317 = vmatmul.bf16.gmra.mxu0 %v181
  %v318 = vpop.f32.mrf.mxu0
  %v319 = vadd.f32 0.0, %v318
  %v320 = vpop.f32.mrf.mxu0
  %v321 = vadd.f32 0.0, %v320
  %322 = vmatmul.bf16.gmra.mxu0 %v182
  %v323 = vpop.f32.mrf.mxu0
  %v324 = vadd.f32 0.0, %v323
  %v325 = vpop.f32.mrf.mxu0
  %v326 = vadd.f32 0.0, %v325
  %327 = vmatmul.bf16.gmra.mxu0 %v183
  %v328 = vpop.f32.mrf.mxu0
  %v329 = vadd.f32 0.0, %v328
  %v330 = vpop.f32.mrf.mxu0
  %v331 = vadd.f32 0.0, %v330
  %332 = vmatmul.bf16.gmra.mxu0 %v184
  %v333 = vpop.f32.mrf.mxu0
  %v334 = vadd.f32 0.0, %v333
  %v335 = vpop.f32.mrf.mxu0
  %v336 = vadd.f32 0.0, %v335
  %337 = vdwg.mxu0
  %v338 = vpack.c.bf16 %v261, %v259
  %v339 = vpack.c.bf16 %v266, %v264
  %v340 = vpack.c.bf16 %v271, %v269
  %v341 = vpack.c.bf16 %v276, %v274
  %v342 = vpack.c.bf16 %v281, %v279
  %v343 = vpack.c.bf16 %v286, %v284
  %v344 = vpack.c.bf16 %v291, %v289
  %v345 = vpack.c.bf16 %v296, %v294
  %v346 = vpack.c.bf16 %v301, %v299
  %v347 = vpack.c.bf16 %v306, %v304
  %v348 = vpack.c.bf16 %v311, %v309
  %v349 = vpack.c.bf16 %v316, %v314
  %v350 = vpack.c.bf16 %v321, %v319
  %v351 = vpack.c.bf16 %v326, %v324
  %v352 = vpack.c.bf16 %v331, %v329
  %v353 = vpack.c.bf16 %v336, %v334
  %v354 = vld [vmem:[%s3] sm:$0x1]
  %v356 = vperm.slane %v354, 0
  %v390 = vunpack.c.l.b16 %v25
  %v391 = vunpack.c.h.b16 %v25
  %v392 = vunpack.c.l.b16 %v26
  %v393 = vunpack.c.h.b16 %v26
  %v394 = vunpack.c.l.b16 %v27
  %v395 = vunpack.c.h.b16 %v27
  %v396 = vunpack.c.l.b16 %v28
  %v397 = vunpack.c.h.b16 %v28
  %v398 = vunpack.c.l.b16 %v29
  %v399 = vunpack.c.h.b16 %v29
  %v400 = vunpack.c.l.b16 %v30
  %v401 = vunpack.c.h.b16 %v30
  %v402 = vunpack.c.l.b16 %v31
  %v403 = vunpack.c.h.b16 %v31
  %v404 = vunpack.c.l.b16 %v32
  %v405 = vunpack.c.h.b16 %v32
  %v406 = vunpack.c.l.b16 %v33
  %v407 = vunpack.c.h.b16 %v33
  %v408 = vunpack.c.l.b16 %v34
  %v409 = vunpack.c.h.b16 %v34
  %v410 = vunpack.c.l.b16 %v35
  %v411 = vunpack.c.h.b16 %v35
  %v412 = vunpack.c.l.b16 %v36
  %v413 = vunpack.c.h.b16 %v36
  %v414 = vunpack.c.l.b16 %v37
  %v415 = vunpack.c.h.b16 %v37
  %v416 = vunpack.c.l.b16 %v38
  %v417 = vunpack.c.h.b16 %v38
  %v418 = vunpack.c.l.b16 %v39
  %v419 = vunpack.c.h.b16 %v39
  %v420 = vunpack.c.l.b16 %v40
  %v421 = vunpack.c.h.b16 %v40
  %v422 = vunpack.c.l.b16 %v41
  %v423 = vunpack.c.h.b16 %v41
  %v424 = vunpack.c.l.b16 %v42
  %v425 = vunpack.c.h.b16 %v42
  %v426 = vunpack.c.l.b16 %v43
  %v427 = vunpack.c.h.b16 %v43
  %v428 = vunpack.c.l.b16 %v44
  %v429 = vunpack.c.h.b16 %v44
  %v430 = vunpack.c.l.b16 %v45
  %v431 = vunpack.c.h.b16 %v45
  %v432 = vunpack.c.l.b16 %v46
  %v433 = vunpack.c.h.b16 %v46
  %v434 = vunpack.c.l.b16 %v47
  %v435 = vunpack.c.h.b16 %v47
  %v436 = vunpack.c.l.b16 %v48
  %v437 = vunpack.c.h.b16 %v48
  %v438 = vunpack.c.l.b16 %v49
  %v439 = vunpack.c.h.b16 %v49
  %v440 = vunpack.c.l.b16 %v50
  %v441 = vunpack.c.h.b16 %v50
  %v442 = vunpack.c.l.b16 %v51
  %v443 = vunpack.c.h.b16 %v51
  %v444 = vunpack.c.l.b16 %v52
  %v445 = vunpack.c.h.b16 %v52
  %v446 = vunpack.c.l.b16 %v53
  %v447 = vunpack.c.h.b16 %v53
  %v448 = vunpack.c.l.b16 %v54
  %v449 = vunpack.c.h.b16 %v54
  %v450 = vunpack.c.l.b16 %v55
  %v451 = vunpack.c.h.b16 %v55
  %v452 = vunpack.c.l.b16 %v56
  %v453 = vunpack.c.h.b16 %v56
  %v454 = vpack.c.b16 %v392, %v390
  %v455 = vpack.c.b16 %v393, %v391
  %v456 = vpack.c.b16 %v396, %v394
  %v457 = vpack.c.b16 %v397, %v395
  %v458 = vpack.c.b16 %v400, %v398
  %v459 = vpack.c.b16 %v401, %v399
  %v460 = vpack.c.b16 %v404, %v402
  %v461 = vpack.c.b16 %v405, %v403
  %v462 = vpack.c.b16 %v408, %v406
  %v463 = vpack.c.b16 %v409, %v407
  %v464 = vpack.c.b16 %v412, %v410
  %v465 = vpack.c.b16 %v413, %v411
  %v466 = vpack.c.b16 %v416, %v414
  %v467 = vpack.c.b16 %v417, %v415
  %v468 = vpack.c.b16 %v420, %v418
  %v469 = vpack.c.b16 %v421, %v419
  %v470 = vpack.c.b16 %v424, %v422
  %v471 = vpack.c.b16 %v425, %v423
  %v472 = vpack.c.b16 %v428, %v426
  %v473 = vpack.c.b16 %v429, %v427
  %v474 = vpack.c.b16 %v432, %v430
  %v475 = vpack.c.b16 %v433, %v431
  %v476 = vpack.c.b16 %v436, %v434
  %v477 = vpack.c.b16 %v437, %v435
  %v478 = vpack.c.b16 %v440, %v438
  %v479 = vpack.c.b16 %v441, %v439
  %v480 = vpack.c.b16 %v444, %v442
  %v481 = vpack.c.b16 %v445, %v443
  %v482 = vpack.c.b16 %v448, %v446
  %v483 = vpack.c.b16 %v449, %v447
  %v484 = vpack.c.b16 %v452, %v450
  %v485 = vpack.c.b16 %v453, %v451
  %518 = vmatpush.bf16.msra.mxu0 %v345
  %519 = vmatpush.bf16.msra.mxu0 %v344
  %520 = vmatpush.bf16.msra.mxu0 %v343
  %521 = vmatpush.bf16.msra.mxu0 %v342
  %522 = vmatpush.bf16.msra.mxu0 %v341
  %523 = vmatpush.bf16.msra.mxu0 %v340
  %524 = vmatpush.bf16.msra.mxu0 %v339
  %525 = vmatpush.bf16.msra.mxu0 %v338
  %526 = vmatmul.bf16.gmra.mxu0 %v454
  %v527 = vpop.f32.mrf.mxu0
  %v528 = vadd.f32 %v356, %v527
  %v529 = vpop.f32.mrf.mxu0
  %v530 = vadd.f32 %v356, %v529
  %531 = vmatmul.bf16.gmra.mxu0 %v456
  %v532 = vpop.f32.mrf.mxu0
  %v533 = vadd.f32 %v356, %v532
  %v534 = vpop.f32.mrf.mxu0
  %v535 = vadd.f32 %v356, %v534
  %536 = vmatmul.bf16.gmra.mxu0 %v458
  %v537 = vpop.f32.mrf.mxu0
  %v538 = vadd.f32 %v356, %v537
  %v539 = vpop.f32.mrf.mxu0
  %v540 = vadd.f32 %v356, %v539
  %541 = vmatmul.bf16.gmra.mxu0 %v460
  %v542 = vpop.f32.mrf.mxu0
  %v543 = vadd.f32 %v356, %v542
  %v544 = vpop.f32.mrf.mxu0
  %v545 = vadd.f32 %v356, %v544
  %546 = vmatmul.bf16.gmra.mxu0 %v462
  %v547 = vpop.f32.mrf.mxu0
  %v548 = vadd.f32 %v356, %v547
  %v549 = vpop.f32.mrf.mxu0
  %v550 = vadd.f32 %v356, %v549
  %551 = vmatmul.bf16.gmra.mxu0 %v464
  %v552 = vpop.f32.mrf.mxu0
  %v553 = vadd.f32 %v356, %v552
  %v554 = vpop.f32.mrf.mxu0
  %v555 = vadd.f32 %v356, %v554
  %556 = vmatmul.bf16.gmra.mxu0 %v466
  %v557 = vpop.f32.mrf.mxu0
  %v558 = vadd.f32 %v356, %v557
  %v559 = vpop.f32.mrf.mxu0
  %v560 = vadd.f32 %v356, %v559
  %561 = vmatmul.bf16.gmra.mxu0 %v468
  %v562 = vpop.f32.mrf.mxu0
  %v563 = vadd.f32 %v356, %v562
  %v564 = vpop.f32.mrf.mxu0
  %v565 = vadd.f32 %v356, %v564
  %566 = vmatmul.bf16.gmra.mxu0 %v470
  %v567 = vpop.f32.mrf.mxu0
  %v568 = vadd.f32 %v356, %v567
  %v569 = vpop.f32.mrf.mxu0
  %v570 = vadd.f32 %v356, %v569
  %571 = vmatmul.bf16.gmra.mxu0 %v472
  %v572 = vpop.f32.mrf.mxu0
  %v573 = vadd.f32 %v356, %v572
  %v574 = vpop.f32.mrf.mxu0
  %v575 = vadd.f32 %v356, %v574
  %576 = vmatmul.bf16.gmra.mxu0 %v474
  %v577 = vpop.f32.mrf.mxu0
  %v578 = vadd.f32 %v356, %v577
  %v579 = vpop.f32.mrf.mxu0
  %v580 = vadd.f32 %v356, %v579
  %581 = vmatmul.bf16.gmra.mxu0 %v476
  %v582 = vpop.f32.mrf.mxu0
  %v583 = vadd.f32 %v356, %v582
  %v584 = vpop.f32.mrf.mxu0
  %v585 = vadd.f32 %v356, %v584
  %586 = vmatmul.bf16.gmra.mxu0 %v478
  %v587 = vpop.f32.mrf.mxu0
  %v588 = vadd.f32 %v356, %v587
  %v589 = vpop.f32.mrf.mxu0
  %v590 = vadd.f32 %v356, %v589
  %591 = vmatmul.bf16.gmra.mxu0 %v480
  %v592 = vpop.f32.mrf.mxu0
  %v593 = vadd.f32 %v356, %v592
  %v594 = vpop.f32.mrf.mxu0
  %v595 = vadd.f32 %v356, %v594
  %596 = vmatmul.bf16.gmra.mxu0 %v482
  %v597 = vpop.f32.mrf.mxu0
  %v598 = vadd.f32 %v356, %v597
  %v599 = vpop.f32.mrf.mxu0
  %v600 = vadd.f32 %v356, %v599
  %601 = vmatmul.bf16.gmra.mxu0 %v484
  %v602 = vpop.f32.mrf.mxu0
  %v603 = vadd.f32 %v356, %v602
  %v604 = vpop.f32.mrf.mxu0
  %v605 = vadd.f32 %v356, %v604
  %606 = vdwg.mxu0
  %607 = vmatpush.bf16.msra.mxu0 %v353
  %608 = vmatpush.bf16.msra.mxu0 %v352
  %609 = vmatpush.bf16.msra.mxu0 %v351
  %610 = vmatpush.bf16.msra.mxu0 %v350
  %611 = vmatpush.bf16.msra.mxu0 %v349
  %612 = vmatpush.bf16.msra.mxu0 %v348
  %613 = vmatpush.bf16.msra.mxu0 %v347
  %614 = vmatpush.bf16.msra.mxu0 %v346
  %615 = vmatmul.bf16.gmra.mxu0 %v455
  %v616 = vpop.f32.mrf.mxu0
  %v617 = vadd.f32 %v528, %v616
  %v618 = vpop.f32.mrf.mxu0
  %v619 = vadd.f32 %v530, %v618
  %620 = vmatmul.bf16.gmra.mxu0 %v457
  %v621 = vpop.f32.mrf.mxu0
  %v622 = vadd.f32 %v533, %v621
  %v623 = vpop.f32.mrf.mxu0
  %v624 = vadd.f32 %v535, %v623
  %625 = vmatmul.bf16.gmra.mxu0 %v459
  %v626 = vpop.f32.mrf.mxu0
  %v627 = vadd.f32 %v538, %v626
  %v628 = vpop.f32.mrf.mxu0
  %v629 = vadd.f32 %v540, %v628
  %630 = vmatmul.bf16.gmra.mxu0 %v461
  %v631 = vpop.f32.mrf.mxu0
  %v632 = vadd.f32 %v543, %v631
  %v633 = vpop.f32.mrf.mxu0
  %v634 = vadd.f32 %v545, %v633
  %635 = vmatmul.bf16.gmra.mxu0 %v463
  %v636 = vpop.f32.mrf.mxu0
  %v637 = vadd.f32 %v548, %v636
  %v638 = vpop.f32.mrf.mxu0
  %v639 = vadd.f32 %v550, %v638
  %640 = vmatmul.bf16.gmra.mxu0 %v465
  %v641 = vpop.f32.mrf.mxu0
  %v642 = vadd.f32 %v553, %v641
  %v643 = vpop.f32.mrf.mxu0
  %v644 = vadd.f32 %v555, %v643
  %645 = vmatmul.bf16.gmra.mxu0 %v467
  %v646 = vpop.f32.mrf.mxu0
  %v647 = vadd.f32 %v558, %v646
  %v648 = vpop.f32.mrf.mxu0
  %v649 = vadd.f32 %v560, %v648
  %650 = vmatmul.bf16.gmra.mxu0 %v469
  %v651 = vpop.f32.mrf.mxu0
  %v652 = vadd.f32 %v563, %v651
  %v653 = vpop.f32.mrf.mxu0
  %v654 = vadd.f32 %v565, %v653
  %655 = vmatmul.bf16.gmra.mxu0 %v471
  %v656 = vpop.f32.mrf.mxu0
  %v657 = vadd.f32 %v568, %v656
  %v658 = vpop.f32.mrf.mxu0
  %v659 = vadd.f32 %v570, %v658
  %660 = vmatmul.bf16.gmra.mxu0 %v473
  %v661 = vpop.f32.mrf.mxu0
  %v662 = vadd.f32 %v573, %v661
  %v663 = vpop.f32.mrf.mxu0
  %v664 = vadd.f32 %v575, %v663
  %665 = vmatmul.bf16.gmra.mxu0 %v475
  %v666 = vpop.f32.mrf.mxu0
  %v667 = vadd.f32 %v578, %v666
  %v668 = vpop.f32.mrf.mxu0
  %v669 = vadd.f32 %v580, %v668
  %670 = vmatmul.bf16.gmra.mxu0 %v477
  %v671 = vpop.f32.mrf.mxu0
  %v672 = vadd.f32 %v583, %v671
  %v673 = vpop.f32.mrf.mxu0
  %v674 = vadd.f32 %v585, %v673
  %675 = vmatmul.bf16.gmra.mxu0 %v479
  %v676 = vpop.f32.mrf.mxu0
  %v677 = vadd.f32 %v588, %v676
  %v678 = vpop.f32.mrf.mxu0
  %v679 = vadd.f32 %v590, %v678
  %680 = vmatmul.bf16.gmra.mxu0 %v481
  %v681 = vpop.f32.mrf.mxu0
  %v682 = vadd.f32 %v593, %v681
  %v683 = vpop.f32.mrf.mxu0
  %v684 = vadd.f32 %v595, %v683
  %685 = vmatmul.bf16.gmra.mxu0 %v483
  %v686 = vpop.f32.mrf.mxu0
  %v687 = vadd.f32 %v598, %v686
  %v688 = vpop.f32.mrf.mxu0
  %v689 = vadd.f32 %v600, %v688
  %690 = vmatmul.bf16.gmra.mxu0 %v485
  %v691 = vpop.f32.mrf.mxu0
  %v692 = vadd.f32 %v603, %v691
  %v693 = vpop.f32.mrf.mxu0
  %v694 = vadd.f32 %v605, %v693
  %695 = vdwg.mxu0
  %696 = vst [vmem:[%s7] sm:$0xff] %v617
  %697 = vst [vmem:[%s7 + $0x8] sm:$0xff] %v619
  %698 = vst [vmem:[%s7 + $0x10] sm:$0xff] %v622
  %699 = vst [vmem:[%s7 + $0x18] sm:$0xff] %v624
  %700 = vst [vmem:[%s7 + $0x20] sm:$0xff] %v627
  %701 = vst [vmem:[%s7 + $0x28] sm:$0xff] %v629
  %702 = vst [vmem:[%s7 + $0x30] sm:$0xff] %v632
  %703 = vst [vmem:[%s7 + $0x38] sm:$0xff] %v634
  %704 = vst [vmem:[%s7 + $0x40] sm:$0xff] %v637
  %705 = vst [vmem:[%s7 + $0x48] sm:$0xff] %v639
  %706 = vst [vmem:[%s7 + $0x50] sm:$0xff] %v642
  %707 = vst [vmem:[%s7 + $0x58] sm:$0xff] %v644
  %708 = vst [vmem:[%s7 + $0x60] sm:$0xff] %v647
  %709 = vst [vmem:[%s7 + $0x68] sm:$0xff] %v649
  %710 = vst [vmem:[%s7 + $0x70] sm:$0xff] %v652
  %711 = vst [vmem:[%s7 + $0x78] sm:$0xff] %v654
  %712 = vst [vmem:[%s7 + $0x80] sm:$0xff] %v657
  %713 = vst [vmem:[%s7 + $0x88] sm:$0xff] %v659
  %714 = vst [vmem:[%s7 + $0x90] sm:$0xff] %v662
  %715 = vst [vmem:[%s7 + $0x98] sm:$0xff] %v664
  %716 = vst [vmem:[%s7 + $0xa0] sm:$0xff] %v667
  %717 = vst [vmem:[%s7 + $0xa8] sm:$0xff] %v669
  %718 = vst [vmem:[%s7 + $0xb0] sm:$0xff] %v672
  %719 = vst [vmem:[%s7 + $0xb8] sm:$0xff] %v674
  %720 = vst [vmem:[%s7 + $0xc0] sm:$0xff] %v677
  %721 = vst [vmem:[%s7 + $0xc8] sm:$0xff] %v679
  %722 = vst [vmem:[%s7 + $0xd0] sm:$0xff] %v682
  %723 = vst [vmem:[%s7 + $0xd8] sm:$0xff] %v684
  %724 = vst [vmem:[%s7 + $0xe0] sm:$0xff] %v687
  %725 = vst [vmem:[%s7 + $0xe8] sm:$0xff] %v689
  %726 = vst [vmem:[%s7 + $0xf0] sm:$0xff] %v692
  %727 = vst [vmem:[%s7 + $0xf8] sm:$0xff] %v694
  %v728 = vmax.f32 %v617, 0.0
  %v729 = vmax.f32 %v619, 0.0
  %v730 = vmax.f32 %v622, 0.0
  %v731 = vmax.f32 %v624, 0.0
  %v732 = vmax.f32 %v627, 0.0
  %v733 = vmax.f32 %v629, 0.0
  %v734 = vmax.f32 %v632, 0.0
  %v735 = vmax.f32 %v634, 0.0
  %v736 = vmax.f32 %v637, 0.0
  %v737 = vmax.f32 %v639, 0.0
  %v738 = vmax.f32 %v642, 0.0
  %v739 = vmax.f32 %v644, 0.0
  %v740 = vmax.f32 %v647, 0.0
  %v741 = vmax.f32 %v649, 0.0
  %v742 = vmax.f32 %v652, 0.0
  %v743 = vmax.f32 %v654, 0.0
  %v744 = vmax.f32 %v657, 0.0
  %v745 = vmax.f32 %v659, 0.0
  %v746 = vmax.f32 %v662, 0.0
  %v747 = vmax.f32 %v664, 0.0
  %v748 = vmax.f32 %v667, 0.0
  %v749 = vmax.f32 %v669, 0.0
  %v750 = vmax.f32 %v672, 0.0
  %v751 = vmax.f32 %v674, 0.0
  %v752 = vmax.f32 %v677, 0.0
  %v753 = vmax.f32 %v679, 0.0
  %v754 = vmax.f32 %v682, 0.0
  %v755 = vmax.f32 %v684, 0.0
  %v756 = vmax.f32 %v687, 0.0
  %v757 = vmax.f32 %v689, 0.0
  %v758 = vmax.f32 %v692, 0.0
  %v759 = vmax.f32 %v694, 0.0
  %v760 = vpack.c.bf16 %v729, %v728
  %v761 = vpack.c.bf16 %v731, %v730
  %v762 = vpack.c.bf16 %v733, %v732
  %v763 = vpack.c.bf16 %v735, %v734
  %v764 = vpack.c.bf16 %v737, %v736
  %v765 = vpack.c.bf16 %v739, %v738
  %v766 = vpack.c.bf16 %v741, %v740
  %v767 = vpack.c.bf16 %v743, %v742
  %v768 = vpack.c.bf16 %v745, %v744
  %v769 = vpack.c.bf16 %v747, %v746
  %v770 = vpack.c.bf16 %v749, %v748
  %v771 = vpack.c.bf16 %v751, %v750
  %v772 = vpack.c.bf16 %v753, %v752
  %v773 = vpack.c.bf16 %v755, %v754
  %v774 = vpack.c.bf16 %v757, %v756
  %v775 = vpack.c.bf16 %v759, %v758
  %v776 = vld [vmem:[%s4] sm:$0xf]
  %v777 = vld [vmem:[%s4 + $0x4] sm:$0xf]
  %v778 = vld [vmem:[%s4 + $0x8] sm:$0xf]
  %v779 = vld [vmem:[%s4 + $0xc] sm:$0xf]
  %v780 = vld [vmem:[%s4 + $0x10] sm:$0xf]
  %v781 = vld [vmem:[%s4 + $0x14] sm:$0xf]
  %v782 = vld [vmem:[%s4 + $0x18] sm:$0xf]
  %v783 = vld [vmem:[%s4 + $0x1c] sm:$0xf]
  %v784 = vld [vmem:[%s4 + $0x20] sm:$0xf]
  %v785 = vld [vmem:[%s4 + $0x24] sm:$0xf]
  %v786 = vld [vmem:[%s4 + $0x28] sm:$0xf]
  %v787 = vld [vmem:[%s4 + $0x2c] sm:$0xf]
  %v788 = vld [vmem:[%s4 + $0x30] sm:$0xf]
  %v789 = vld [vmem:[%s4 + $0x34] sm:$0xf]
  %v790 = vld [vmem:[%s4 + $0x38] sm:$0xf]
  %v791 = vld [vmem:[%s4 + $0x3c] sm:$0xf]
  %v808 = vunpack.c.l.b16 %v776
  %v809 = vunpack.c.l.b16 %v777
  %v810 = vunpack.c.l.b16 %v778
  %v811 = vunpack.c.l.b16 %v779
  %v812 = vunpack.c.l.b16 %v780
  %v813 = vunpack.c.l.b16 %v781
  %v814 = vunpack.c.l.b16 %v782
  %v815 = vunpack.c.l.b16 %v783
  %v816 = vunpack.c.l.b16 %v784
  %v817 = vunpack.c.l.b16 %v785
  %v818 = vunpack.c.l.b16 %v786
  %v819 = vunpack.c.l.b16 %v787
  %v820 = vunpack.c.l.b16 %v788
  %v821 = vunpack.c.l.b16 %v789
  %v822 = vunpack.c.l.b16 %v790
  %v823 = vunpack.c.l.b16 %v791
  %v824 = vpack.c.b16 %v809, %v808
  %v825 = vpack.c.b16 %v811, %v810
  %v826 = vpack.c.b16 %v813, %v812
  %v827 = vpack.c.b16 %v815, %v814
  %v828 = vpack.c.b16 %v817, %v816
  %v829 = vpack.c.b16 %v819, %v818
  %v830 = vpack.c.b16 %v821, %v820
  %v831 = vpack.c.b16 %v823, %v822
  %840 = vmatpush.bf16.msra.mxu0 %v831
  %841 = vmatpush.bf16.msra.mxu0 %v830
  %842 = vmatpush.bf16.msra.mxu0 %v829
  %843 = vmatpush.bf16.msra.mxu0 %v828
  %844 = vmatpush.bf16.msra.mxu0 %v827
  %845 = vmatpush.bf16.msra.mxu0 %v826
  %846 = vmatpush.bf16.msra.mxu0 %v825
  %847 = vmatpush.bf16.msra.mxu0 %v824
  %848 = vmatmul.bf16.gmra.mxu0 %v760
  %v849 = vpop.f32.mrf.mxu0
  %v850 = vadd.f32 0.0, %v849
  %v851 = vpop.f32.mrf.mxu0
  %v852 = vadd.f32 0.0, %v851
  %853 = vmatmul.bf16.gmra.mxu0 %v761
  %v854 = vpop.f32.mrf.mxu0
  %v855 = vadd.f32 0.0, %v854
  %v856 = vpop.f32.mrf.mxu0
  %v857 = vadd.f32 0.0, %v856
  %858 = vmatmul.bf16.gmra.mxu0 %v762
  %v859 = vpop.f32.mrf.mxu0
  %v860 = vadd.f32 0.0, %v859
  %v861 = vpop.f32.mrf.mxu0
  %v862 = vadd.f32 0.0, %v861
  %863 = vmatmul.bf16.gmra.mxu0 %v763
  %v864 = vpop.f32.mrf.mxu0
  %v865 = vadd.f32 0.0, %v864
  %v866 = vpop.f32.mrf.mxu0
  %v867 = vadd.f32 0.0, %v866
  %868 = vmatmul.bf16.gmra.mxu0 %v764
  %v869 = vpop.f32.mrf.mxu0
  %v870 = vadd.f32 0.0, %v869
  %v871 = vpop.f32.mrf.mxu0
  %v872 = vadd.f32 0.0, %v871
  %873 = vmatmul.bf16.gmra.mxu0 %v765
  %v874 = vpop.f32.mrf.mxu0
  %v875 = vadd.f32 0.0, %v874
  %v876 = vpop.f32.mrf.mxu0
  %v877 = vadd.f32 0.0, %v876
  %878 = vmatmul.bf16.gmra.mxu0 %v766
  %v879 = vpop.f32.mrf.mxu0
  %v880 = vadd.f32 0.0, %v879
  %v881 = vpop.f32.mrf.mxu0
  %v882 = vadd.f32 0.0, %v881
  %883 = vmatmul.bf16.gmra.mxu0 %v767
  %v884 = vpop.f32.mrf.mxu0
  %v885 = vadd.f32 0.0, %v884
  %v886 = vpop.f32.mrf.mxu0
  %v887 = vadd.f32 0.0, %v886
  %888 = vmatmul.bf16.gmra.mxu0 %v768
  %v889 = vpop.f32.mrf.mxu0
  %v890 = vadd.f32 0.0, %v889
  %v891 = vpop.f32.mrf.mxu0
  %v892 = vadd.f32 0.0, %v891
  %893 = vmatmul.bf16.gmra.mxu0 %v769
  %v894 = vpop.f32.mrf.mxu0
  %v895 = vadd.f32 0.0, %v894
  %v896 = vpop.f32.mrf.mxu0
  %v897 = vadd.f32 0.0, %v896
  %898 = vmatmul.bf16.gmra.mxu0 %v770
  %v899 = vpop.f32.mrf.mxu0
  %v900 = vadd.f32 0.0, %v899
  %v901 = vpop.f32.mrf.mxu0
  %v902 = vadd.f32 0.0, %v901
  %903 = vmatmul.bf16.gmra.mxu0 %v771
  %v904 = vpop.f32.mrf.mxu0
  %v905 = vadd.f32 0.0, %v904
  %v906 = vpop.f32.mrf.mxu0
  %v907 = vadd.f32 0.0, %v906
  %908 = vmatmul.bf16.gmra.mxu0 %v772
  %v909 = vpop.f32.mrf.mxu0
  %v910 = vadd.f32 0.0, %v909
  %v911 = vpop.f32.mrf.mxu0
  %v912 = vadd.f32 0.0, %v911
  %913 = vmatmul.bf16.gmra.mxu0 %v773
  %v914 = vpop.f32.mrf.mxu0
  %v915 = vadd.f32 0.0, %v914
  %v916 = vpop.f32.mrf.mxu0
  %v917 = vadd.f32 0.0, %v916
  %918 = vmatmul.bf16.gmra.mxu0 %v774
  %v919 = vpop.f32.mrf.mxu0
  %v920 = vadd.f32 0.0, %v919
  %v921 = vpop.f32.mrf.mxu0
  %v922 = vadd.f32 0.0, %v921
  %923 = vmatmul.bf16.gmra.mxu0 %v775
  %v924 = vpop.f32.mrf.mxu0
  %v925 = vadd.f32 0.0, %v924
  %v926 = vpop.f32.mrf.mxu0
  %v927 = vadd.f32 0.0, %v926
  %928 = vdwg.mxu0
  %v929 = vpack.c.bf16 %v852, %v850
  %v930 = vpack.c.bf16 %v857, %v855
  %v931 = vpack.c.bf16 %v862, %v860
  %v932 = vpack.c.bf16 %v867, %v865
  %v933 = vpack.c.bf16 %v872, %v870
  %v934 = vpack.c.bf16 %v877, %v875
  %v935 = vpack.c.bf16 %v882, %v880
  %v936 = vpack.c.bf16 %v887, %v885
  %v937 = vpack.c.bf16 %v892, %v890
  %v938 = vpack.c.bf16 %v897, %v895
  %v939 = vpack.c.bf16 %v902, %v900
  %v940 = vpack.c.bf16 %v907, %v905
  %v941 = vpack.c.bf16 %v912, %v910
  %v942 = vpack.c.bf16 %v917, %v915
  %v943 = vpack.c.bf16 %v922, %v920
  %v944 = vpack.c.bf16 %v927, %v925
  %v945 = vld [vmem:[%s5] sm:$0x1]
  %v947 = vperm.slane %v945, 0
  %949 = vmatpush.bf16.msra.mxu0 %v936
  %950 = vmatpush.bf16.msra.mxu0 %v935
  %951 = vmatpush.bf16.msra.mxu0 %v934
  %952 = vmatpush.bf16.msra.mxu0 %v933
  %953 = vmatpush.bf16.msra.mxu0 %v932
  %954 = vmatpush.bf16.msra.mxu0 %v931
  %955 = vmatpush.bf16.msra.mxu0 %v930
  %956 = vmatpush.bf16.msra.mxu0 %v929
  %957 = vmatmul.bf16.gmra.mxu0 %v454
  %v958 = vpop.f32.mrf.mxu0
  %v959 = vadd.f32 %v947, %v958
  %v960 = vpop.f32.mrf.mxu0
  %v961 = vadd.f32 %v947, %v960
  %962 = vmatmul.bf16.gmra.mxu0 %v456
  %v963 = vpop.f32.mrf.mxu0
  %v964 = vadd.f32 %v947, %v963
  %v965 = vpop.f32.mrf.mxu0
  %v966 = vadd.f32 %v947, %v965
  %967 = vmatmul.bf16.gmra.mxu0 %v458
  %v968 = vpop.f32.mrf.mxu0
  %v969 = vadd.f32 %v947, %v968
  %v970 = vpop.f32.mrf.mxu0
  %v971 = vadd.f32 %v947, %v970
  %972 = vmatmul.bf16.gmra.mxu0 %v460
  %v973 = vpop.f32.mrf.mxu0
  %v974 = vadd.f32 %v947, %v973
  %v975 = vpop.f32.mrf.mxu0
  %v976 = vadd.f32 %v947, %v975
  %977 = vmatmul.bf16.gmra.mxu0 %v462
  %v978 = vpop.f32.mrf.mxu0
  %v979 = vadd.f32 %v947, %v978
  %v980 = vpop.f32.mrf.mxu0
  %v981 = vadd.f32 %v947, %v980
  %982 = vmatmul.bf16.gmra.mxu0 %v464
  %v983 = vpop.f32.mrf.mxu0
  %v984 = vadd.f32 %v947, %v983
  %v985 = vpop.f32.mrf.mxu0
  %v986 = vadd.f32 %v947, %v985
  %987 = vmatmul.bf16.gmra.mxu0 %v466
  %v988 = vpop.f32.mrf.mxu0
  %v989 = vadd.f32 %v947, %v988
  %v990 = vpop.f32.mrf.mxu0
  %v991 = vadd.f32 %v947, %v990
  %992 = vmatmul.bf16.gmra.mxu0 %v468
  %v993 = vpop.f32.mrf.mxu0
  %v994 = vadd.f32 %v947, %v993
  %v995 = vpop.f32.mrf.mxu0
  %v996 = vadd.f32 %v947, %v995
  %997 = vmatmul.bf16.gmra.mxu0 %v470
  %v998 = vpop.f32.mrf.mxu0
  %v999 = vadd.f32 %v947, %v998
  %v1000 = vpop.f32.mrf.mxu0
  %v1001 = vadd.f32 %v947, %v1000
  %1002 = vmatmul.bf16.gmra.mxu0 %v472
  %v1003 = vpop.f32.mrf.mxu0
  %v1004 = vadd.f32 %v947, %v1003
  %v1005 = vpop.f32.mrf.mxu0
  %v1006 = vadd.f32 %v947, %v1005
  %1007 = vmatmul.bf16.gmra.mxu0 %v474
  %v1008 = vpop.f32.mrf.mxu0
  %v1009 = vadd.f32 %v947, %v1008
  %v1010 = vpop.f32.mrf.mxu0
  %v1011 = vadd.f32 %v947, %v1010
  %1012 = vmatmul.bf16.gmra.mxu0 %v476
  %v1013 = vpop.f32.mrf.mxu0
  %v1014 = vadd.f32 %v947, %v1013
  %v1015 = vpop.f32.mrf.mxu0
  %v1016 = vadd.f32 %v947, %v1015
  %1017 = vmatmul.bf16.gmra.mxu0 %v478
  %v1018 = vpop.f32.mrf.mxu0
  %v1019 = vadd.f32 %v947, %v1018
  %v1020 = vpop.f32.mrf.mxu0
  %v1021 = vadd.f32 %v947, %v1020
  %1022 = vmatmul.bf16.gmra.mxu0 %v480
  %v1023 = vpop.f32.mrf.mxu0
  %v1024 = vadd.f32 %v947, %v1023
  %v1025 = vpop.f32.mrf.mxu0
  %v1026 = vadd.f32 %v947, %v1025
  %1027 = vmatmul.bf16.gmra.mxu0 %v482
  %v1028 = vpop.f32.mrf.mxu0
  %v1029 = vadd.f32 %v947, %v1028
  %v1030 = vpop.f32.mrf.mxu0
  %v1031 = vadd.f32 %v947, %v1030
  %1032 = vmatmul.bf16.gmra.mxu0 %v484
  %v1033 = vpop.f32.mrf.mxu0
  %v1034 = vadd.f32 %v947, %v1033
  %v1035 = vpop.f32.mrf.mxu0
  %v1036 = vadd.f32 %v947, %v1035
  %1037 = vdwg.mxu0
  %1038 = vmatpush.bf16.msra.mxu0 %v944
  %1039 = vmatpush.bf16.msra.mxu0 %v943
  %1040 = vmatpush.bf16.msra.mxu0 %v942
  %1041 = vmatpush.bf16.msra.mxu0 %v941
  %1042 = vmatpush.bf16.msra.mxu0 %v940
  %1043 = vmatpush.bf16.msra.mxu0 %v939
  %1044 = vmatpush.bf16.msra.mxu0 %v938
  %1045 = vmatpush.bf16.msra.mxu0 %v937
  %1046 = vmatmul.bf16.gmra.mxu0 %v455
  %v1047 = vpop.f32.mrf.mxu0
  %v1048 = vadd.f32 %v959, %v1047
  %v1049 = vpop.f32.mrf.mxu0
  %v1050 = vadd.f32 %v961, %v1049
  %1051 = vmatmul.bf16.gmra.mxu0 %v457
  %v1052 = vpop.f32.mrf.mxu0
  %v1053 = vadd.f32 %v964, %v1052
  %v1054 = vpop.f32.mrf.mxu0
  %v1055 = vadd.f32 %v966, %v1054
  %1056 = vmatmul.bf16.gmra.mxu0 %v459
  %v1057 = vpop.f32.mrf.mxu0
  %v1058 = vadd.f32 %v969, %v1057
  %v1059 = vpop.f32.mrf.mxu0
  %v1060 = vadd.f32 %v971, %v1059
  %1061 = vmatmul.bf16.gmra.mxu0 %v461
  %v1062 = vpop.f32.mrf.mxu0
  %v1063 = vadd.f32 %v974, %v1062
  %v1064 = vpop.f32.mrf.mxu0
  %v1065 = vadd.f32 %v976, %v1064
  %1066 = vmatmul.bf16.gmra.mxu0 %v463
  %v1067 = vpop.f32.mrf.mxu0
  %v1068 = vadd.f32 %v979, %v1067
  %v1069 = vpop.f32.mrf.mxu0
  %v1070 = vadd.f32 %v981, %v1069
  %1071 = vmatmul.bf16.gmra.mxu0 %v465
  %v1072 = vpop.f32.mrf.mxu0
  %v1073 = vadd.f32 %v984, %v1072
  %v1074 = vpop.f32.mrf.mxu0
  %v1075 = vadd.f32 %v986, %v1074
  %1076 = vmatmul.bf16.gmra.mxu0 %v467
  %v1077 = vpop.f32.mrf.mxu0
  %v1078 = vadd.f32 %v989, %v1077
  %v1079 = vpop.f32.mrf.mxu0
  %v1080 = vadd.f32 %v991, %v1079
  %1081 = vmatmul.bf16.gmra.mxu0 %v469
  %v1082 = vpop.f32.mrf.mxu0
  %v1083 = vadd.f32 %v994, %v1082
  %v1084 = vpop.f32.mrf.mxu0
  %v1085 = vadd.f32 %v996, %v1084
  %1086 = vmatmul.bf16.gmra.mxu0 %v471
  %v1087 = vpop.f32.mrf.mxu0
  %v1088 = vadd.f32 %v999, %v1087
  %v1089 = vpop.f32.mrf.mxu0
  %v1090 = vadd.f32 %v1001, %v1089
  %1091 = vmatmul.bf16.gmra.mxu0 %v473
  %v1092 = vpop.f32.mrf.mxu0
  %v1093 = vadd.f32 %v1004, %v1092
  %v1094 = vpop.f32.mrf.mxu0
  %v1095 = vadd.f32 %v1006, %v1094
  %1096 = vmatmul.bf16.gmra.mxu0 %v475
  %v1097 = vpop.f32.mrf.mxu0
  %v1098 = vadd.f32 %v1009, %v1097
  %v1099 = vpop.f32.mrf.mxu0
  %v1100 = vadd.f32 %v1011, %v1099
  %1101 = vmatmul.bf16.gmra.mxu0 %v477
  %v1102 = vpop.f32.mrf.mxu0
  %v1103 = vadd.f32 %v1014, %v1102
  %v1104 = vpop.f32.mrf.mxu0
  %v1105 = vadd.f32 %v1016, %v1104
  %1106 = vmatmul.bf16.gmra.mxu0 %v479
  %v1107 = vpop.f32.mrf.mxu0
  %v1108 = vadd.f32 %v1019, %v1107
  %v1109 = vpop.f32.mrf.mxu0
  %v1110 = vadd.f32 %v1021, %v1109
  %1111 = vmatmul.bf16.gmra.mxu0 %v481
  %v1112 = vpop.f32.mrf.mxu0
  %v1113 = vadd.f32 %v1024, %v1112
  %v1114 = vpop.f32.mrf.mxu0
  %v1115 = vadd.f32 %v1026, %v1114
  %1116 = vmatmul.bf16.gmra.mxu0 %v483
  %v1117 = vpop.f32.mrf.mxu0
  %v1118 = vadd.f32 %v1029, %v1117
  %v1119 = vpop.f32.mrf.mxu0
  %v1120 = vadd.f32 %v1031, %v1119
  %1121 = vmatmul.bf16.gmra.mxu0 %v485
  %v1122 = vpop.f32.mrf.mxu0
  %v1123 = vadd.f32 %v1034, %v1122
  %v1124 = vpop.f32.mrf.mxu0
  %v1125 = vadd.f32 %v1036, %v1124
  %1126 = vdwg.mxu0
  %1127 = vst [vmem:[%s6] sm:$0xff] %v1048
  %1128 = vst [vmem:[%s6 + $0x8] sm:$0xff] %v1050
  %1129 = vst [vmem:[%s6 + $0x10] sm:$0xff] %v1053
  %1130 = vst [vmem:[%s6 + $0x18] sm:$0xff] %v1055
  %1131 = vst [vmem:[%s6 + $0x20] sm:$0xff] %v1058
  %1132 = vst [vmem:[%s6 + $0x28] sm:$0xff] %v1060
  %1133 = vst [vmem:[%s6 + $0x30] sm:$0xff] %v1063
  %1134 = vst [vmem:[%s6 + $0x38] sm:$0xff] %v1065
  %1135 = vst [vmem:[%s6 + $0x40] sm:$0xff] %v1068
  %1136 = vst [vmem:[%s6 + $0x48] sm:$0xff] %v1070
  %1137 = vst [vmem:[%s6 + $0x50] sm:$0xff] %v1073
  %1138 = vst [vmem:[%s6 + $0x58] sm:$0xff] %v1075
  %1139 = vst [vmem:[%s6 + $0x60] sm:$0xff] %v1078
  %1140 = vst [vmem:[%s6 + $0x68] sm:$0xff] %v1080
  %1141 = vst [vmem:[%s6 + $0x70] sm:$0xff] %v1083
  %1142 = vst [vmem:[%s6 + $0x78] sm:$0xff] %v1085
  %1143 = vst [vmem:[%s6 + $0x80] sm:$0xff] %v1088
  %1144 = vst [vmem:[%s6 + $0x88] sm:$0xff] %v1090
  %1145 = vst [vmem:[%s6 + $0x90] sm:$0xff] %v1093
  %1146 = vst [vmem:[%s6 + $0x98] sm:$0xff] %v1095
  %1147 = vst [vmem:[%s6 + $0xa0] sm:$0xff] %v1098
  %1148 = vst [vmem:[%s6 + $0xa8] sm:$0xff] %v1100
  %1149 = vst [vmem:[%s6 + $0xb0] sm:$0xff] %v1103
  %1150 = vst [vmem:[%s6 + $0xb8] sm:$0xff] %v1105
  %1151 = vst [vmem:[%s6 + $0xc0] sm:$0xff] %v1108
  %1152 = vst [vmem:[%s6 + $0xc8] sm:$0xff] %v1110
  %1153 = vst [vmem:[%s6 + $0xd0] sm:$0xff] %v1113
  %1154 = vst [vmem:[%s6 + $0xd8] sm:$0xff] %v1115
  %1155 = vst [vmem:[%s6 + $0xe0] sm:$0xff] %v1118
  %1156 = vst [vmem:[%s6 + $0xe8] sm:$0xff] %v1120
  %1157 = vst [vmem:[%s6 + $0xf0] sm:$0xff] %v1123
  %1158 = vst [vmem:[%s6 + $0xf8] sm:$0xff] %v1125
  // Predicated region
  $region26: #{gcn_net_forward.1} parent=0 // pred_check
    _
  $region27: #{gcn_net_forward.1} parent=0 // pred_check_branch
    %1160 = sbr.rel (0) target = $region29
  $region28: #{gcn_net_forward.1} parent=0 // pred_region
    _
  $region29: #{gcn_net_forward.1} parent=0 // pred_fallthru
    _
  // Predicated region
  $region30: #{gcn_net_forward.1} parent=0 // pred_check
    _
  $region31: #{gcn_net_forward.1} parent=0 // pred_check_branch
    %1162 = sbr.rel (0) target = $region33
  $region32: #{gcn_net_forward.1} parent=0 // pred_region
    _
  $region33: #{gcn_net_forward.1} parent=0 // pred_fallthru
    _
  // Predicated region
  $region34: #{gcn_net_forward.1} parent=0 // pred_check
    _
  $region35: #{gcn_net_forward.1} parent=0 // pred_check_branch
    %1164 = sbr.rel (0) target = $region37
  $region36: #{gcn_net_forward.1} parent=0 // pred_region
    _
  $region37: #{gcn_net_forward.1} parent=0 // pred_fallthru
    _
  // Predicated region
  $region38: #{gcn_net_forward.1} parent=0 // pred_check
    _
  $region39: #{gcn_net_forward.1} parent=0 // pred_check_branch
    %1166 = sbr.rel (0) target = $region41
  $region40: #{gcn_net_forward.1} parent=0 // pred_region
    _
  $region41: #{gcn_net_forward.1} parent=0 // pred_fallthru
    _

</llo_original>
